<compile_context>
chip_gen: v7x
topology: tpu7x:2x2x1
jax: 0.10.0
libtpu: 0.0.40
codegen_flags: <defaults>
</compile_context>

<pallas_src>
import jax
import jax.numpy as jnp
from jax.experimental import pallas as pl
from jax.experimental.pallas import tpu as pltpu

EPS = 1e-5


def _threefc_kernel(x_ref, w1_ref, w2_ref, w3_ref, bn_ref, o_ref):
    """Whole forward pass in VMEM (resident data is well under 1 MiB at B=8).

    bn_ref rows (f32, lane-padded to W = max(256, out_pad)):
      0: gamma1[256]   1: beta1[256]   2: gamma2[128]   3: beta2[128]
      4: fc3 bias[out_pad]
    """
    out_pad = w3_ref.shape[1]
    x = x_ref[...].astype(jnp.bfloat16)                        # cast in-kernel

    # ---- fc1 (bias-free) + bn1 (training stats) + relu ---------------------
    h = jnp.dot(x, w1_ref[...], preferred_element_type=jnp.float32)   # (B,256) f32
    g1, be1 = bn_ref[0:1, :256], bn_ref[1:2, :256]
    m = jnp.mean(h, axis=0, keepdims=True)
    d = h - m
    v = jnp.mean(d * d, axis=0, keepdims=True)                 # biased variance
    h = jnp.maximum(d * (g1 * jax.lax.rsqrt(v + EPS)) + be1,
                    0.0).astype(jnp.bfloat16)

    # ---- fc2 (bias-free) + bn2 + relu ---------------------------------------
    h = jnp.dot(h, w2_ref[...], preferred_element_type=jnp.float32)   # (B,128) f32
    g2, be2 = bn_ref[2:3, :128], bn_ref[3:4, :128]
    m = jnp.mean(h, axis=0, keepdims=True)
    d = h - m
    v = jnp.mean(d * d, axis=0, keepdims=True)
    h = jnp.maximum(d * (g2 * jax.lax.rsqrt(v + EPS)) + be2,
                    0.0).astype(jnp.bfloat16)

    # ---- fc3 (output lane-padded to a multiple of 128) ----------------------
    out = jnp.dot(h, w3_ref[...], preferred_element_type=jnp.float32)
    o_ref[...] = (out + bn_ref[4:5, :out_pad]).astype(o_ref.dtype)


@jax.jit
def threefc_forward_padded(x, kparams):
    """Forward pass; returns the lane-padded (B, out_pad) logits in f32.

    Consumers should take `[:, :outputs]` inside their own jit (or work on the
    padded array directly) — returning padded avoids a standalone slice
    dispatch + HBM round-trip on this µs-scale kernel.

    If the model is served repeatedly, batch requests before calling
    (M ~ 128 on v5e, ~256 on v6e/v7x) to fill the MXU and amortize the
    ~0.5 MiB weight DMA; that is the only real throughput lever at this size.
    """
    w1, w2, w3p, bn = kparams
    xf = x.reshape(-1, 784)                        # == x.view(-1, 784); dtype kept
    B = xf.shape[0]
    out_pad = w3p.shape[1]

    full = lambda a: pl.BlockSpec(a.shape, lambda: (0,) * a.ndim)

    # Advisory cost hint so XLA can overlap this custom call in larger graphs.
    flops = 2 * B * (784 * 256 + 256 * 128 + 128 * out_pad)
    bytes_accessed = (xf.size * xf.dtype.itemsize            # input
                      + (w1.size + w2.size + w3p.size) * 2   # bf16 weights
                      + bn.size * 4                          # packed BN/bias
                      + B * out_pad * 4)                     # f32 output
    cost = pl.CostEstimate(flops=flops, transcendentals=256 + 128,
                           bytes_accessed=bytes_accessed)

    # Whole-batch-resident (grid=()) is only valid while everything fits VMEM.
    est_vmem = ((xf.size * xf.dtype.itemsize
                 + (w1.size + w2.size + w3p.size) * 2 + bn.size * 4
                 + B * (256 + 128 + out_pad) * 4             # f32 intermediates
                 + B * out_pad * 4) * 2)                     # buffering slack
    compiler_params = None
    if est_vmem > 12 * 2**20:
        # v5e default scoped VMEM is 16 MiB; raise explicitly (capped at the
        # 64 MiB v7x physical ceiling) rather than fail compile.
        # TODO(synk): for B beyond a few thousand rows, switch to a row-tiled
        # two-phase-BN variant (per-tile sum / sum-of-squares accumulation,
        # then normalize) instead of keeping the whole batch resident.
        compiler_params = pltpu.CompilerParams(
            vmem_limit_bytes=int(min(est_vmem, 64 * 2**20)))

    return pl.pallas_call(
        _threefc_kernel,
        out_shape=jax.ShapeDtypeStruct((B, out_pad), jnp.float32),
        grid=(),
        in_specs=[full(xf), full(w1), full(w2), full(w3p), full(bn)],
        out_specs=pl.BlockSpec((B, out_pad), lambda: (0, 0)),
        cost_estimate=cost,
        compiler_params=compiler_params,
    )(xf, w1, w2, w3p, bn)


# --------------------------------------------------------------------------- #
# Parameter construction / packing
# --------------------------------------------------------------------------- #
def init_params(key, outputs):
    """PyTorch-faithful init: nn.Linear uniform +-1/sqrt(fan_in) for W and b,
    BatchNorm1d gamma=1 / beta=0.  Linear weights stored as (in, out), f32."""
    ks = jax.random.split(key, 6)

    def linear(kw, kb, fan_in, fan_out):
        bound = 1.0 / jnp.sqrt(fan_in)
        w = jax.random.uniform(kw, (fan_in, fan_out), jnp.float32, -bound, bound)
        b = jax.random.uniform(kb, (1, fan_out), jnp.float32, -bound, bound)
        return w, b

    w1, b1 = linear(ks[0], ks[1], 784, 256)
    w2, b2 = linear(ks[2], ks[3], 256, 128)
    w3, b3 = linear(ks[4], ks[5], 128, outputs)
    g1, be1 = jnp.ones((1, 256), jnp.float32), jnp.zeros((1, 256), jnp.float32)
    g2, be2 = jnp.ones((1, 128), jnp.float32), jnp.zeros((1, 128), jnp.float32)
    return (w1, b1, g1, be1, w2, b2, g2, be2, w3, b3)


def pack_kernel_params(params, outputs):
    """Pack module params for the kernel:
       * bf16 matmul weights (f32 accumulation happens on the MXU),
       * fc1/fc2 biases dropped (cancelled by training-mode BN mean subtraction),
       * fc3 weights/bias lane-padded so the output width is a multiple of 128,
       * all per-feature vectors (g1, be1, g2, be2, b3) packed into ONE (5, W)
         f32 array to minimize the number of input DMAs.
    """
    (w1, b1, g1, be1, w2, b2, g2, be2, w3, b3) = params
    del b1, b2                                    # mathematically a no-op before BN
    out_pad = ((outputs + 127) // 128) * 128
    W = max(256, out_pad)

    w3p = jnp.zeros((w3.shape[0], out_pad), jnp.float32).at[:, :outputs].set(w3)

    bn = jnp.zeros((5, W), jnp.float32)
    bn = bn.at[0, :256].set(g1.reshape(-1))
    bn = bn.at[1, :256].set(be1.reshape(-1))
    bn = bn.at[2, :128].set(g2.reshape(-1))
    bn = bn.at[3, :128].set(be2.reshape(-1))
    bn = bn.at[4, :outputs].set(b3.reshape(-1))

    return (w1.astype(jnp.bfloat16),
            w2.astype(jnp.bfloat16),
            w3p.astype(jnp.bfloat16),
            bn)


# --------------------------------------------------------------------------- #
# References for correctness checking
# --------------------------------------------------------------------------- #
def threefc_ref_bf16_padded(x, kparams):
    """Pure-JAX mirror of the kernel's exact numerics (bf16 matmul operands,
    f32 accumulation and elementwise math); returns the padded output."""
    w1, w2, w3p, bn = kparams
    out_pad = w3p.shape[1]

    def bn_relu(h, g, be):
        m = jnp.mean(h, axis=0, keepdims=True)
        d = h - m
        v = jnp.mean(d * d, axis=0, keepdims=True)
        return jnp.maximum(d * (g * jax.lax.rsqrt(v + EPS)) + be, 0.0)

    h = x.reshape(-1, 784).astype(jnp.bfloat16)
    h = jnp.dot(h, w1, preferred_element_type=jnp.float32)
    h = bn_relu(h, bn[0:1, :256], bn[1:2, :256]).astype(jnp.bfloat16)
    h = jnp.dot(h, w2, preferred_element_type=jnp.float32)
    h = bn_relu(h, bn[2:3, :128], bn[3:4, :128]).astype(jnp.bfloat16)
    return jnp.dot(h, w3p, preferred_element_type=jnp.float32) + bn[4:5, :out_pad]


def threefc_ref_f32(x, params):
    """Full-precision reference of the original module (training-mode BN),
    including the fc1/fc2 biases that the kernel legitimately drops."""
    (w1, b1, g1, be1, w2, b2, g2, be2, w3, b3) = params
    h = x.reshape(-1, 784).astype(jnp.float32)

    def bn_relu(h, g, be):
        m = jnp.mean(h, axis=0, keepdims=True)
        v = jnp.mean((h - m) ** 2, axis=0, keepdims=True)
        return jnp.maximum((h - m) * jax.lax.rsqrt(v + EPS) * g + be, 0.0)

    h = bn_relu(h @ w1 + b1, g1, be1)
    h = bn_relu(h @ w2 + b2, g2, be2)
    return h @ w3 + b3


# TODO(synk): BatchNorm1d running_mean/running_var buffer updates (a training
# side effect of the PyTorch module) are not emitted; forward values match
# training-mode batch statistics exactly.

if __name__ == "__main__":
    outputs = 10          # e.g. MNIST / CIFAR-10 classes
    B = 8                 # small batch, consistent with the module's use

    key = jax.random.PRNGKey(0)
    k_x, k_p = jax.random.split(key)
    x = jax.random.normal(k_x, (B, 1, 28, 28), jnp.float32)   # NCHW input
    params = init_params(k_p, outputs)
    kparams = pack_kernel_params(params, outputs)

    y_pad = threefc_forward_padded(x, kparams)                # (B, out_pad)
    y_pad = jax.block_until_ready(y_pad)
    assert y_pad.shape == (B, kparams[2].shape[1])
    y = y_pad[:, :outputs]                                    # consumer-side slice
    assert y.shape == (B, outputs)

    # Tight check: kernel matches its own-numerics (bf16-operand) reference.
    y_bf16 = threefc_ref_bf16_padded(x, kparams)
    assert jnp.allclose(y_pad, y_bf16, atol=5e-3, rtol=5e-3), \
        "mismatch vs bf16 reference"

    # Loose check: kernel tracks the full-f32 original-module forward.
    y_f32 = threefc_ref_f32(x, params)
    assert jnp.allclose(y, y_f32, atol=1e-1, rtol=1e-1), \
        "drift vs f32 module reference"

    print("KERNEL_OK")
</pallas_src>

<mosaic_0001>
module attributes {stable_mosaic.version = 11 : i64} {
  func.func @_threefc_kernel(%arg0: memref<8x784xf32, #tpu.memory_space<vmem>>, %arg1: memref<784x256xbf16, #tpu.memory_space<vmem>>, %arg2: memref<256x128xbf16, #tpu.memory_space<vmem>>, %arg3: memref<128x128xbf16, #tpu.memory_space<vmem>>, %arg4: memref<5x256xf32, #tpu.memory_space<vmem>>, %arg5: memref<8x128xf32, #tpu.memory_space<vmem>>) attributes {dimension_semantics = [], scalar_prefetch = 0 : i64, scratch_operands = 0 : i64, tpu.core_type = #tpu.core_type<tc>} {
    %c0 = arith.constant 0 : index
    %c0_0 = arith.constant 0 : index
    %0 = vector.load %arg0[%c0, %c0_0] : memref<8x784xf32, #tpu.memory_space<vmem>>, vector<8x784xf32>
    %1 = arith.truncf %0 : vector<8x784xf32> to vector<8x784xbf16>
    %c0_1 = arith.constant 0 : index
    %c0_2 = arith.constant 0 : index
    %2 = vector.load %arg1[%c0_1, %c0_2] : memref<784x256xbf16, #tpu.memory_space<vmem>>, vector<784x256xbf16>
    %cst = arith.constant dense<0.000000e+00> : vector<8x256xf32>
    %3 = tpu.matmul %1, %2, %cst {dimension_numbers = #tpu.dot_dimension_numbers<[1], [0], [0], [1], [0, 0, 1, 1], [], []>} : vector<8x784xbf16>, vector<784x256xbf16>, vector<8x256xf32> -> vector<8x256xf32>
    %c0_3 = arith.constant 0 : index
    %c0_4 = arith.constant 0 : index
    %4 = vector.load %arg4[%c0_3, %c0_4] : memref<5x256xf32, #tpu.memory_space<vmem>>, vector<1x256xf32>
    %c1 = arith.constant 1 : index
    %c0_5 = arith.constant 0 : index
    %5 = vector.load %arg4[%c1, %c0_5] : memref<5x256xf32, #tpu.memory_space<vmem>>, vector<1x256xf32>
    %cst_6 = arith.constant dense<0.000000e+00> : vector<256xf32>
    %6 = vector.multi_reduction <add>, %3, %cst_6 [0] : vector<8x256xf32> to vector<256xf32>
    %7 = vector.shape_cast %6 : vector<256xf32> to vector<1x256xf32>
    %cst_7 = arith.constant 8.000000e+00 : f32
    %8 = vector.broadcast %cst_7 : f32 to vector<1x256xf32>
    %9 = arith.divf %7, %8 : vector<1x256xf32>
    %10 = vector.broadcast %9 : vector<1x256xf32> to vector<8x256xf32>
    %11 = arith.subf %3, %10 : vector<8x256xf32>
    %12 = arith.mulf %11, %11 : vector<8x256xf32>
    %cst_8 = arith.constant dense<0.000000e+00> : vector<256xf32>
    %13 = vector.multi_reduction <add>, %12, %cst_8 [0] : vector<8x256xf32> to vector<256xf32>
    %14 = vector.shape_cast %13 : vector<256xf32> to vector<1x256xf32>
    %cst_9 = arith.constant 8.000000e+00 : f32
    %15 = vector.broadcast %cst_9 : f32 to vector<1x256xf32>
    %16 = arith.divf %14, %15 : vector<1x256xf32>
    %cst_10 = arith.constant 9.99999974E-6 : f32
    %17 = vector.broadcast %cst_10 : f32 to vector<1x256xf32>
    %18 = arith.addf %16, %17 : vector<1x256xf32>
    %19 = math.rsqrt %18 : vector<1x256xf32>
    %20 = arith.mulf %4, %19 : vector<1x256xf32>
    %21 = vector.broadcast %20 : vector<1x256xf32> to vector<8x256xf32>
    %22 = arith.mulf %11, %21 : vector<8x256xf32>
    %23 = vector.broadcast %5 : vector<1x256xf32> to vector<8x256xf32>
    %24 = arith.addf %22, %23 : vector<8x256xf32>
    %cst_11 = arith.constant 0.000000e+00 : f32
    %25 = vector.broadcast %cst_11 : f32 to vector<8x256xf32>
    %26 = arith.maximumf %24, %25 : vector<8x256xf32>
    %27 = arith.truncf %26 : vector<8x256xf32> to vector<8x256xbf16>
    %c0_12 = arith.constant 0 : index
    %c0_13 = arith.constant 0 : index
    %28 = vector.load %arg2[%c0_12, %c0_13] : memref<256x128xbf16, #tpu.memory_space<vmem>>, vector<256x128xbf16>
    %cst_14 = arith.constant dense<0.000000e+00> : vector<8x128xf32>
    %29 = tpu.matmul %27, %28, %cst_14 {dimension_numbers = #tpu.dot_dimension_numbers<[1], [0], [0], [1], [0, 0, 1, 1], [], []>} : vector<8x256xbf16>, vector<256x128xbf16>, vector<8x128xf32> -> vector<8x128xf32>
    %c2 = arith.constant 2 : index
    %c0_15 = arith.constant 0 : index
    %30 = vector.load %arg4[%c2, %c0_15] : memref<5x256xf32, #tpu.memory_space<vmem>>, vector<1x128xf32>
    %c3 = arith.constant 3 : index
    %c0_16 = arith.constant 0 : index
    %31 = vector.load %arg4[%c3, %c0_16] : memref<5x256xf32, #tpu.memory_space<vmem>>, vector<1x128xf32>
    %cst_17 = arith.constant dense<0.000000e+00> : vector<128xf32>
    %32 = vector.multi_reduction <add>, %29, %cst_17 [0] : vector<8x128xf32> to vector<128xf32>
    %33 = vector.shape_cast %32 : vector<128xf32> to vector<1x128xf32>
    %cst_18 = arith.constant 8.000000e+00 : f32
    %34 = vector.broadcast %cst_18 : f32 to vector<1x128xf32>
    %35 = arith.divf %33, %34 : vector<1x128xf32>
    %36 = vector.broadcast %35 : vector<1x128xf32> to vector<8x128xf32>
    %37 = arith.subf %29, %36 : vector<8x128xf32>
    %38 = arith.mulf %37, %37 : vector<8x128xf32>
    %cst_19 = arith.constant dense<0.000000e+00> : vector<128xf32>
    %39 = vector.multi_reduction <add>, %38, %cst_19 [0] : vector<8x128xf32> to vector<128xf32>
    %40 = vector.shape_cast %39 : vector<128xf32> to vector<1x128xf32>
    %cst_20 = arith.constant 8.000000e+00 : f32
    %41 = vector.broadcast %cst_20 : f32 to vector<1x128xf32>
    %42 = arith.divf %40, %41 : vector<1x128xf32>
    %cst_21 = arith.constant 9.99999974E-6 : f32
    %43 = vector.broadcast %cst_21 : f32 to vector<1x128xf32>
    %44 = arith.addf %42, %43 : vector<1x128xf32>
    %45 = math.rsqrt %44 : vector<1x128xf32>
    %46 = arith.mulf %30, %45 : vector<1x128xf32>
    %47 = vector.broadcast %46 : vector<1x128xf32> to vector<8x128xf32>
    %48 = arith.mulf %37, %47 : vector<8x128xf32>
    %49 = vector.broadcast %31 : vector<1x128xf32> to vector<8x128xf32>
    %50 = arith.addf %48, %49 : vector<8x128xf32>
    %cst_22 = arith.constant 0.000000e+00 : f32
    %51 = vector.broadcast %cst_22 : f32 to vector<8x128xf32>
    %52 = arith.maximumf %50, %51 : vector<8x128xf32>
    %53 = arith.truncf %52 : vector<8x128xf32> to vector<8x128xbf16>
    %c0_23 = arith.constant 0 : index
    %c0_24 = arith.constant 0 : index
    %54 = vector.load %arg3[%c0_23, %c0_24] : memref<128x128xbf16, #tpu.memory_space<vmem>>, vector<128x128xbf16>
    %cst_25 = arith.constant dense<0.000000e+00> : vector<8x128xf32>
    %55 = tpu.matmul %53, %54, %cst_25 {dimension_numbers = #tpu.dot_dimension_numbers<[1], [0], [0], [1], [0, 0, 1, 1], [], []>} : vector<8x128xbf16>, vector<128x128xbf16>, vector<8x128xf32> -> vector<8x128xf32>
    %c4 = arith.constant 4 : index
    %c0_26 = arith.constant 0 : index
    %56 = vector.load %arg4[%c4, %c0_26] : memref<5x256xf32, #tpu.memory_space<vmem>>, vector<1x128xf32>
    %57 = vector.broadcast %56 : vector<1x128xf32> to vector<8x128xf32>
    %58 = arith.addf %55, %57 : vector<8x128xf32>
    %c0_27 = arith.constant 0 : index
    %c0_28 = arith.constant 0 : index
    %59 = vector.load %arg5[%c0_27, %c0_28] : memref<8x128xf32, #tpu.memory_space<vmem>>, vector<8x128xf32>
    tpu.vector_store %arg5[%c0_27, %c0_28], %58 {strides = array<i32>} : memref<8x128xf32, #tpu.memory_space<vmem>>, vector<8x128xf32>,
    return
  }
}

</mosaic_0001>

<llo_original>
// kernel: threefc_forward_padded.1
$region0: #{threefc_forward_padded.1}
  #allocation0 [shape = 'u32[]', space=smem, size = 0x4, offset = 0x4, fixed_abs, tag = 'smem constant byte address 0x4 - core index']
  #allocation1 [shape = 'u32[144,128]{1,0:T(1,128)}', space=vmem, size = 0x12000, scoped, tag = 'internal scratch']
  %s0 = inlined_call_operand.vmem [shape: f32[8,784], index: 0, kind: input, shape index: {}]
  %s1 = inlined_call_operand.vmem [shape: bf16[784,256], index: 1, kind: input, shape index: {}]
  %s2 = inlined_call_operand.hbm [shape: bf16[256,128], index: 2, kind: input, shape index: {}]
  %s3 = inlined_call_operand.hbm [shape: bf16[128,128], index: 3, kind: input, shape index: {}]
  %s4 = inlined_call_operand.vmem [shape: f32[5,256], index: 4, kind: input, shape index: {}]
  %s5 = inlined_call_operand.hbm [shape: f32[8,128], index: 5, kind: output, shape index: {}]
  %s6 = sld [smem:[#allocation0]]
  $region38: #{threefc_forward_padded.1} parent=0
    _
  %s8 = ssub.s32 1, %s6
  %s9 = scalar_select 0, %s8, %s6
  $region1: #{threefc_forward_padded.1} parent=0
    #allocation2 [shape = 'u8[65536]{0}', space=vmem, size = 0x10000, scoped, tag = 'input window, operand 2, single buffered']
    #allocation3 [shape = 's32[1]{0}', space=sflag, size = 0x4, scoped, tag = 'scoped memory for threefc_forward_padded.1']
    #allocation4 [shape = 's32[1]{0}', space=sflag, size = 0x4, scoped, tag = 'scoped memory for threefc_forward_padded.1']
    #allocation5 [shape = 'u8[32768]{0}', space=vmem, size = 0x8000, scoped, tag = 'input window, operand 3, single buffered']
    #allocation6 [shape = 's32[1]{0}', space=sflag, size = 0x4, scoped, tag = 'scoped memory for threefc_forward_padded.1']
    #allocation7 [shape = 'u8[4096]{0}', space=vmem, size = 0x1000, scoped, tag = 'output window, operand 0, single buffered']
    %10 = vsyncpa [#allocation3], 0
    %11 = vsyncpa [#allocation6], 0
    %12 = vsyncpa [#allocation4], 0
    // Predicated region
    $region2: #{threefc_forward_padded.1} parent=1 // pred_check
      _
    $region3: #{threefc_forward_padded.1} parent=1 // pred_check_branch
      %14 = sbr.rel (0) target = $region5
    $region4: #{threefc_forward_padded.1} parent=1 // pred_region
      _
    $region5: #{threefc_forward_padded.1} parent=1 // pred_fallthru
      _
    // Predicated region
    $region6: #{threefc_forward_padded.1} parent=1 // pred_check
      _
    $region7: #{threefc_forward_padded.1} parent=1 // pred_check_branch
      %16 = sbr.rel (0) target = $region9
    $region8: #{threefc_forward_padded.1} parent=1 // pred_region
      _
    $region9: #{threefc_forward_padded.1} parent=1 // pred_fallthru
      _
    // Predicated region
    $region10: #{threefc_forward_padded.1} parent=1 // pred_check
      _
    $region11: #{threefc_forward_padded.1} parent=1 // pred_check_branch
      %18 = sbr.rel (0) target = $region13
    $region12: #{threefc_forward_padded.1} parent=1 // pred_region
      %s20 = ssub.s32 2048, 2048
      %21 = vsyncadd [#allocation3], %s20
      %s22 = sshll.u32 [#allocation2], 4
      %s23 = int_to_ptr.vmem [resolvable:$true] %s22
      %28 = dma.hbm_to_vmem [thread:$0]  %s2, 2048, %s23, [#allocation3], 64, 64, 4
    $region13: #{threefc_forward_padded.1} parent=1 // pred_fallthru
      _
    // Predicated region
    $region14: #{threefc_forward_padded.1} parent=1 // pred_check
      _
    $region15: #{threefc_forward_padded.1} parent=1 // pred_check_branch
      %30 = sbr.rel (0) target = $region17
    $region16: #{threefc_forward_padded.1} parent=1 // pred_region
      %s32 = ssub.s32 1024, 1024
      %33 = vsyncadd [#allocation6], %s32
      %s34 = sshll.u32 [#allocation5], 4
      %s35 = int_to_ptr.vmem [resolvable:$true] %s34
      %40 = dma.hbm_to_vmem [thread:$0]  %s3, 1024, %s35, [#allocation6], 64, 64, 4
    $region17: #{threefc_forward_padded.1} parent=1 // pred_fallthru
      _
    // Predicated region
    $region18: #{threefc_forward_padded.1} parent=1 // pred_check
      _
    $region19: #{threefc_forward_padded.1} parent=1 // pred_check_branch
      %42 = sbr.rel (0) target = $region21
    $region20: #{threefc_forward_padded.1} parent=1 // pred_region
      _
    $region21: #{threefc_forward_padded.1} parent=1 // pred_fallthru
      _
    // Predicated region
    $region22: #{threefc_forward_padded.1} parent=1 // pred_check
      _
    $region23: #{threefc_forward_padded.1} parent=1 // pred_check_branch
      %44 = sbr.rel (0) target = $region25
    $region24: #{threefc_forward_padded.1} parent=1 // pred_region
      %45 = dma.done [#allocation3], 2048
    $region25: #{threefc_forward_padded.1} parent=1 // pred_fallthru
      _
    // Predicated region
    $region26: #{threefc_forward_padded.1} parent=1 // pred_check
      _
    $region27: #{threefc_forward_padded.1} parent=1 // pred_check_branch
      %47 = sbr.rel (0) target = $region29
    $region28: #{threefc_forward_padded.1} parent=1 // pred_region
      %48 = dma.done [#allocation6], 1024
    $region29: #{threefc_forward_padded.1} parent=1 // pred_fallthru
      _
    %v50 = vld [vmem:[%s0] sm:$0xff]
    %v51 = vld [vmem:[%s0 + $0x8] sm:$0xff]
    %v52 = vld [vmem:[%s0 + $0x10] sm:$0xff]
    %v53 = vld [vmem:[%s0 + $0x18] sm:$0xff]
    %v54 = vld [vmem:[%s0 + $0x20] sm:$0xff]
    %v55 = vld [vmem:[%s0 + $0x28] sm:$0xff]
    %v56 = vld [vmem:[%s0 + $0x30] sm:$0xff]
    %v57 = vpack.c.bf16 %v50, %v50
    %v58 = vpack.c.bf16 %v51, %v51
    %v59 = vpack.c.bf16 %v52, %v52
    %v60 = vpack.c.bf16 %v53, %v53
    %v61 = vpack.c.bf16 %v54, %v54
    %v62 = vpack.c.bf16 %v55, %v55
    %v63 = vpack.c.bf16 %v56, %v56
    %v64 = vld [vmem:[%s1] sm:$0xff]
    %v65 = vld [vmem:[%s1 + $0x8] sm:$0xff]
    %v66 = vld [vmem:[%s1 + $0x10] sm:$0xff]
    %v67 = vld [vmem:[%s1 + $0x18] sm:$0xff]
    %v68 = vld [vmem:[%s1 + $0x20] sm:$0xff]
    %v69 = vld [vmem:[%s1 + $0x28] sm:$0xff]
    %v70 = vld [vmem:[%s1 + $0x30] sm:$0xff]
    %v71 = vld [vmem:[%s1 + $0x38] sm:$0xff]
    %v72 = vld [vmem:[%s1 + $0x40] sm:$0xff]
    %v73 = vld [vmem:[%s1 + $0x48] sm:$0xff]
    %v74 = vld [vmem:[%s1 + $0x50] sm:$0xff]
    %v75 = vld [vmem:[%s1 + $0x58] sm:$0xff]
    %v76 = vld [vmem:[%s1 + $0x60] sm:$0xff]
    %v77 = vld [vmem:[%s1 + $0x68] sm:$0xff]
    %v78 = vld [vmem:[%s1 + $0x70] sm:$0xff]
    %v79 = vld [vmem:[%s1 + $0x78] sm:$0xff]
    %v80 = vld [vmem:[%s1 + $0x80] sm:$0xff]
    %v81 = vld [vmem:[%s1 + $0x88] sm:$0xff]
    %v82 = vld [vmem:[%s1 + $0x90] sm:$0xff]
    %v83 = vld [vmem:[%s1 + $0x98] sm:$0xff]
    %v84 = vld [vmem:[%s1 + $0xa0] sm:$0xff]
    %v85 = vld [vmem:[%s1 + $0xa8] sm:$0xff]
    %v86 = vld [vmem:[%s1 + $0xb0] sm:$0xff]
    %v87 = vld [vmem:[%s1 + $0xb8] sm:$0xff]
    %v88 = vld [vmem:[%s1 + $0xc0] sm:$0xff]
    %v89 = vld [vmem:[%s1 + $0xc8] sm:$0xff]
    %v90 = vld [vmem:[%s1 + $0xd0] sm:$0xff]
    %v91 = vld [vmem:[%s1 + $0xd8] sm:$0xff]
    %v92 = vld [vmem:[%s1 + $0xe0] sm:$0xff]
    %v93 = vld [vmem:[%s1 + $0xe8] sm:$0xff]
    %v94 = vld [vmem:[%s1 + $0xf0] sm:$0xff]
    %v95 = vld [vmem:[%s1 + $0xf8] sm:$0xff]
    %v96 = vld [vmem:[%s1 + $0x100] sm:$0xff]
    %v97 = vld [vmem:[%s1 + $0x108] sm:$0xff]
    %v98 = vld [vmem:[%s1 + $0x110] sm:$0xff]
    %v99 = vld [vmem:[%s1 + $0x118] sm:$0xff]
    %v100 = vld [vmem:[%s1 + $0x120] sm:$0xff]
    %v101 = vld [vmem:[%s1 + $0x128] sm:$0xff]
    %v102 = vld [vmem:[%s1 + $0x130] sm:$0xff]
    %v103 = vld [vmem:[%s1 + $0x138] sm:$0xff]
    %v104 = vld [vmem:[%s1 + $0x140] sm:$0xff]
    %v105 = vld [vmem:[%s1 + $0x148] sm:$0xff]
    %v106 = vld [vmem:[%s1 + $0x150] sm:$0xff]
    %v107 = vld [vmem:[%s1 + $0x158] sm:$0xff]
    %v108 = vld [vmem:[%s1 + $0x160] sm:$0xff]
    %v109 = vld [vmem:[%s1 + $0x168] sm:$0xff]
    %v110 = vld [vmem:[%s1 + $0x170] sm:$0xff]
    %v111 = vld [vmem:[%s1 + $0x178] sm:$0xff]
    %v112 = vld [vmem:[%s1 + $0x180] sm:$0xff]
    %v113 = vld [vmem:[%s1 + $0x188] sm:$0xff]
    %v114 = vld [vmem:[%s1 + $0x190] sm:$0xff]
    %v115 = vld [vmem:[%s1 + $0x198] sm:$0xff]
    %v116 = vld [vmem:[%s1 + $0x1a0] sm:$0xff]
    %v117 = vld [vmem:[%s1 + $0x1a8] sm:$0xff]
    %v118 = vld [vmem:[%s1 + $0x1b0] sm:$0xff]
    %v119 = vld [vmem:[%s1 + $0x1b8] sm:$0xff]
    %v120 = vld [vmem:[%s1 + $0x1c0] sm:$0xff]
    %v121 = vld [vmem:[%s1 + $0x1c8] sm:$0xff]
    %v122 = vld [vmem:[%s1 + $0x1d0] sm:$0xff]
    %v123 = vld [vmem:[%s1 + $0x1d8] sm:$0xff]
    %v124 = vld [vmem:[%s1 + $0x1e0] sm:$0xff]
    %v125 = vld [vmem:[%s1 + $0x1e8] sm:$0xff]
    %v126 = vld [vmem:[%s1 + $0x1f0] sm:$0xff]
    %v127 = vld [vmem:[%s1 + $0x1f8] sm:$0xff]
    %v128 = vld [vmem:[%s1 + $0x200] sm:$0xff]
    %v129 = vld [vmem:[%s1 + $0x208] sm:$0xff]
    %v130 = vld [vmem:[%s1 + $0x210] sm:$0xff]
    %v131 = vld [vmem:[%s1 + $0x218] sm:$0xff]
    %v132 = vld [vmem:[%s1 + $0x220] sm:$0xff]
    %v133 = vld [vmem:[%s1 + $0x228] sm:$0xff]
    %v134 = vld [vmem:[%s1 + $0x230] sm:$0xff]
    %v135 = vld [vmem:[%s1 + $0x238] sm:$0xff]
    %v136 = vld [vmem:[%s1 + $0x240] sm:$0xff]
    %v137 = vld [vmem:[%s1 + $0x248] sm:$0xff]
    %v138 = vld [vmem:[%s1 + $0x250] sm:$0xff]
    %v139 = vld [vmem:[%s1 + $0x258] sm:$0xff]
    %v140 = vld [vmem:[%s1 + $0x260] sm:$0xff]
    %v141 = vld [vmem:[%s1 + $0x268] sm:$0xff]
    %v142 = vld [vmem:[%s1 + $0x270] sm:$0xff]
    %v143 = vld [vmem:[%s1 + $0x278] sm:$0xff]
    %v144 = vld [vmem:[%s1 + $0x280] sm:$0xff]
    %v145 = vld [vmem:[%s1 + $0x288] sm:$0xff]
    %v146 = vld [vmem:[%s1 + $0x290] sm:$0xff]
    %v147 = vld [vmem:[%s1 + $0x298] sm:$0xff]
    %v148 = vld [vmem:[%s1 + $0x2a0] sm:$0xff]
    %v149 = vld [vmem:[%s1 + $0x2a8] sm:$0xff]
    %v150 = vld [vmem:[%s1 + $0x2b0] sm:$0xff]
    %v151 = vld [vmem:[%s1 + $0x2b8] sm:$0xff]
    %v152 = vld [vmem:[%s1 + $0x2c0] sm:$0xff]
    %v153 = vld [vmem:[%s1 + $0x2c8] sm:$0xff]
    %v154 = vld [vmem:[%s1 + $0x2d0] sm:$0xff]
    %v155 = vld [vmem:[%s1 + $0x2d8] sm:$0xff]
    %v156 = vld [vmem:[%s1 + $0x2e0] sm:$0xff]
    %v157 = vld [vmem:[%s1 + $0x2e8] sm:$0xff]
    %v158 = vld [vmem:[%s1 + $0x2f0] sm:$0xff]
    %v159 = vld [vmem:[%s1 + $0x2f8] sm:$0xff]
    %v160 = vld [vmem:[%s1 + $0x300] sm:$0xff]
    %v161 = vld [vmem:[%s1 + $0x308] sm:$0xff]
    %v260 = vunpack.c.l.b16 %v64
    %v261 = vunpack.c.h.b16 %v64
    %v262 = vunpack.c.l.b16 %v65
    %v263 = vunpack.c.h.b16 %v65
    %v264 = vunpack.c.l.b16 %v66
    %v265 = vunpack.c.h.b16 %v66
    %v266 = vunpack.c.l.b16 %v67
    %v267 = vunpack.c.h.b16 %v67
    %v268 = vunpack.c.l.b16 %v68
    %v269 = vunpack.c.h.b16 %v68
    %v270 = vunpack.c.l.b16 %v69
    %v271 = vunpack.c.h.b16 %v69
    %v272 = vunpack.c.l.b16 %v70
    %v273 = vunpack.c.h.b16 %v70
    %v274 = vunpack.c.l.b16 %v71
    %v275 = vunpack.c.h.b16 %v71
    %v276 = vunpack.c.l.b16 %v72
    %v277 = vunpack.c.h.b16 %v72
    %v278 = vunpack.c.l.b16 %v73
    %v279 = vunpack.c.h.b16 %v73
    %v280 = vunpack.c.l.b16 %v74
    %v281 = vunpack.c.h.b16 %v74
    %v282 = vunpack.c.l.b16 %v75
    %v283 = vunpack.c.h.b16 %v75
    %v284 = vunpack.c.l.b16 %v76
    %v285 = vunpack.c.h.b16 %v76
    %v286 = vunpack.c.l.b16 %v77
    %v287 = vunpack.c.h.b16 %v77
    %v288 = vunpack.c.l.b16 %v78
    %v289 = vunpack.c.h.b16 %v78
    %v290 = vunpack.c.l.b16 %v79
    %v291 = vunpack.c.h.b16 %v79
    %v292 = vunpack.c.l.b16 %v80
    %v293 = vunpack.c.h.b16 %v80
    %v294 = vunpack.c.l.b16 %v81
    %v295 = vunpack.c.h.b16 %v81
    %v296 = vunpack.c.l.b16 %v82
    %v297 = vunpack.c.h.b16 %v82
    %v298 = vunpack.c.l.b16 %v83
    %v299 = vunpack.c.h.b16 %v83
    %v300 = vunpack.c.l.b16 %v84
    %v301 = vunpack.c.h.b16 %v84
    %v302 = vunpack.c.l.b16 %v85
    %v303 = vunpack.c.h.b16 %v85
    %v304 = vunpack.c.l.b16 %v86
    %v305 = vunpack.c.h.b16 %v86
    %v306 = vunpack.c.l.b16 %v87
    %v307 = vunpack.c.h.b16 %v87
    %v308 = vunpack.c.l.b16 %v88
    %v309 = vunpack.c.h.b16 %v88
    %v310 = vunpack.c.l.b16 %v89
    %v311 = vunpack.c.h.b16 %v89
    %v312 = vunpack.c.l.b16 %v90
    %v313 = vunpack.c.h.b16 %v90
    %v314 = vunpack.c.l.b16 %v91
    %v315 = vunpack.c.h.b16 %v91
    %v316 = vunpack.c.l.b16 %v92
    %v317 = vunpack.c.h.b16 %v92
    %v318 = vunpack.c.l.b16 %v93
    %v319 = vunpack.c.h.b16 %v93
    %v320 = vunpack.c.l.b16 %v94
    %v321 = vunpack.c.h.b16 %v94
    %v322 = vunpack.c.l.b16 %v95
    %v323 = vunpack.c.h.b16 %v95
    %v324 = vunpack.c.l.b16 %v96
    %v325 = vunpack.c.h.b16 %v96
    %v326 = vunpack.c.l.b16 %v97
    %v327 = vunpack.c.h.b16 %v97
    %v328 = vunpack.c.l.b16 %v98
    %v329 = vunpack.c.h.b16 %v98
    %v330 = vunpack.c.l.b16 %v99
    %v331 = vunpack.c.h.b16 %v99
    %v332 = vunpack.c.l.b16 %v100
    %v333 = vunpack.c.h.b16 %v100
    %v334 = vunpack.c.l.b16 %v101
    %v335 = vunpack.c.h.b16 %v101
    %v336 = vunpack.c.l.b16 %v102
    %v337 = vunpack.c.h.b16 %v102
    %v338 = vunpack.c.l.b16 %v103
    %v339 = vunpack.c.h.b16 %v103
    %v340 = vunpack.c.l.b16 %v104
    %v341 = vunpack.c.h.b16 %v104
    %v342 = vunpack.c.l.b16 %v105
    %v343 = vunpack.c.h.b16 %v105
    %v344 = vunpack.c.l.b16 %v106
    %v345 = vunpack.c.h.b16 %v106
    %v346 = vunpack.c.l.b16 %v107
    %v347 = vunpack.c.h.b16 %v107
    %v348 = vunpack.c.l.b16 %v108
    %v349 = vunpack.c.h.b16 %v108
    %v350 = vunpack.c.l.b16 %v109
    %v351 = vunpack.c.h.b16 %v109
    %v352 = vunpack.c.l.b16 %v110
    %v353 = vunpack.c.h.b16 %v110
    %v354 = vunpack.c.l.b16 %v111
    %v355 = vunpack.c.h.b16 %v111
    %v356 = vunpack.c.l.b16 %v112
    %v357 = vunpack.c.h.b16 %v112
    %v358 = vunpack.c.l.b16 %v113
    %v359 = vunpack.c.h.b16 %v113
    %v360 = vunpack.c.l.b16 %v114
    %v361 = vunpack.c.h.b16 %v114
    %v362 = vunpack.c.l.b16 %v115
    %v363 = vunpack.c.h.b16 %v115
    %v364 = vunpack.c.l.b16 %v116
    %v365 = vunpack.c.h.b16 %v116
    %v366 = vunpack.c.l.b16 %v117
    %v367 = vunpack.c.h.b16 %v117
    %v368 = vunpack.c.l.b16 %v118
    %v369 = vunpack.c.h.b16 %v118
    %v370 = vunpack.c.l.b16 %v119
    %v371 = vunpack.c.h.b16 %v119
    %v372 = vunpack.c.l.b16 %v120
    %v373 = vunpack.c.h.b16 %v120
    %v374 = vunpack.c.l.b16 %v121
    %v375 = vunpack.c.h.b16 %v121
    %v376 = vunpack.c.l.b16 %v122
    %v377 = vunpack.c.h.b16 %v122
    %v378 = vunpack.c.l.b16 %v123
    %v379 = vunpack.c.h.b16 %v123
    %v380 = vunpack.c.l.b16 %v124
    %v381 = vunpack.c.h.b16 %v124
    %v382 = vunpack.c.l.b16 %v125
    %v383 = vunpack.c.h.b16 %v125
    %v384 = vunpack.c.l.b16 %v126
    %v385 = vunpack.c.h.b16 %v126
    %v386 = vunpack.c.l.b16 %v127
    %v387 = vunpack.c.h.b16 %v127
    %v388 = vunpack.c.l.b16 %v128
    %v389 = vunpack.c.h.b16 %v128
    %v390 = vunpack.c.l.b16 %v129
    %v391 = vunpack.c.h.b16 %v129
    %v392 = vunpack.c.l.b16 %v130
    %v393 = vunpack.c.h.b16 %v130
    %v394 = vunpack.c.l.b16 %v131
    %v395 = vunpack.c.h.b16 %v131
    %v396 = vunpack.c.l.b16 %v132
    %v397 = vunpack.c.h.b16 %v132
    %v398 = vunpack.c.l.b16 %v133
    %v399 = vunpack.c.h.b16 %v133
    %v400 = vunpack.c.l.b16 %v134
    %v401 = vunpack.c.h.b16 %v134
    %v402 = vunpack.c.l.b16 %v135
    %v403 = vunpack.c.h.b16 %v135
    %v404 = vunpack.c.l.b16 %v136
    %v405 = vunpack.c.h.b16 %v136
    %v406 = vunpack.c.l.b16 %v137
    %v407 = vunpack.c.h.b16 %v137
    %v408 = vunpack.c.l.b16 %v138
    %v409 = vunpack.c.h.b16 %v138
    %v410 = vunpack.c.l.b16 %v139
    %v411 = vunpack.c.h.b16 %v139
    %v412 = vunpack.c.l.b16 %v140
    %v413 = vunpack.c.h.b16 %v140
    %v414 = vunpack.c.l.b16 %v141
    %v415 = vunpack.c.h.b16 %v141
    %v416 = vunpack.c.l.b16 %v142
    %v417 = vunpack.c.h.b16 %v142
    %v418 = vunpack.c.l.b16 %v143
    %v419 = vunpack.c.h.b16 %v143
    %v420 = vunpack.c.l.b16 %v144
    %v421 = vunpack.c.h.b16 %v144
    %v422 = vunpack.c.l.b16 %v145
    %v423 = vunpack.c.h.b16 %v145
    %v424 = vunpack.c.l.b16 %v146
    %v425 = vunpack.c.h.b16 %v146
    %v426 = vunpack.c.l.b16 %v147
    %v427 = vunpack.c.h.b16 %v147
    %v428 = vunpack.c.l.b16 %v148
    %v429 = vunpack.c.h.b16 %v148
    %v430 = vunpack.c.l.b16 %v149
    %v431 = vunpack.c.h.b16 %v149
    %v432 = vunpack.c.l.b16 %v150
    %v433 = vunpack.c.h.b16 %v150
    %v434 = vunpack.c.l.b16 %v151
    %v435 = vunpack.c.h.b16 %v151
    %v436 = vunpack.c.l.b16 %v152
    %v437 = vunpack.c.h.b16 %v152
    %v438 = vunpack.c.l.b16 %v153
    %v439 = vunpack.c.h.b16 %v153
    %v440 = vunpack.c.l.b16 %v154
    %v441 = vunpack.c.h.b16 %v154
    %v442 = vunpack.c.l.b16 %v155
    %v443 = vunpack.c.h.b16 %v155
    %v444 = vunpack.c.l.b16 %v156
    %v445 = vunpack.c.h.b16 %v156
    %v446 = vunpack.c.l.b16 %v157
    %v447 = vunpack.c.h.b16 %v157
    %v448 = vunpack.c.l.b16 %v158
    %v449 = vunpack.c.h.b16 %v158
    %v450 = vunpack.c.l.b16 %v159
    %v451 = vunpack.c.h.b16 %v159
    %v452 = vunpack.c.l.b16 %v160
    %v453 = vunpack.c.h.b16 %v160
    %v454 = vunpack.c.l.b16 %v161
    %v455 = vunpack.c.h.b16 %v161
    %v456 = vpack.c.b16 %v262, %v260
    %v457 = vpack.c.b16 %v263, %v261
    %v458 = vpack.c.b16 %v266, %v264
    %v459 = vpack.c.b16 %v267, %v265
    %v460 = vpack.c.b16 %v270, %v268
    %v461 = vpack.c.b16 %v271, %v269
    %v462 = vpack.c.b16 %v274, %v272
    %v463 = vpack.c.b16 %v275, %v273
    %v464 = vpack.c.b16 %v278, %v276
    %v465 = vpack.c.b16 %v279, %v277
    %v466 = vpack.c.b16 %v282, %v280
    %v467 = vpack.c.b16 %v283, %v281
    %v468 = vpack.c.b16 %v286, %v284
    %v469 = vpack.c.b16 %v287, %v285
    %v470 = vpack.c.b16 %v290, %v288
    %v471 = vpack.c.b16 %v291, %v289
    %v472 = vpack.c.b16 %v294, %v292
    %v473 = vpack.c.b16 %v295, %v293
    %v474 = vpack.c.b16 %v298, %v296
    %v475 = vpack.c.b16 %v299, %v297
    %v476 = vpack.c.b16 %v302, %v300
    %v477 = vpack.c.b16 %v303, %v301
    %v478 = vpack.c.b16 %v306, %v304
    %v479 = vpack.c.b16 %v307, %v305
    %v480 = vpack.c.b16 %v310, %v308
    %v481 = vpack.c.b16 %v311, %v309
    %v482 = vpack.c.b16 %v314, %v312
    %v483 = vpack.c.b16 %v315, %v313
    %v484 = vpack.c.b16 %v318, %v316
    %v485 = vpack.c.b16 %v319, %v317
    %v486 = vpack.c.b16 %v322, %v320
    %v487 = vpack.c.b16 %v323, %v321
    %v488 = vpack.c.b16 %v326, %v324
    %v489 = vpack.c.b16 %v327, %v325
    %v490 = vpack.c.b16 %v330, %v328
    %v491 = vpack.c.b16 %v331, %v329
    %v492 = vpack.c.b16 %v334, %v332
    %v493 = vpack.c.b16 %v335, %v333
    %v494 = vpack.c.b16 %v338, %v336
    %v495 = vpack.c.b16 %v339, %v337
    %v496 = vpack.c.b16 %v342, %v340
    %v497 = vpack.c.b16 %v343, %v341
    %v498 = vpack.c.b16 %v346, %v344
    %v499 = vpack.c.b16 %v347, %v345
    %v500 = vpack.c.b16 %v350, %v348
    %v501 = vpack.c.b16 %v351, %v349
    %v502 = vpack.c.b16 %v354, %v352
    %v503 = vpack.c.b16 %v355, %v353
    %v504 = vpack.c.b16 %v358, %v356
    %v505 = vpack.c.b16 %v359, %v357
    %v506 = vpack.c.b16 %v362, %v360
    %v507 = vpack.c.b16 %v363, %v361
    %v508 = vpack.c.b16 %v366, %v364
    %v509 = vpack.c.b16 %v367, %v365
    %v510 = vpack.c.b16 %v370, %v368
    %v511 = vpack.c.b16 %v371, %v369
    %v512 = vpack.c.b16 %v374, %v372
    %v513 = vpack.c.b16 %v375, %v373
    %v514 = vpack.c.b16 %v378, %v376
    %v515 = vpack.c.b16 %v379, %v377
    %v516 = vpack.c.b16 %v382, %v380
    %v517 = vpack.c.b16 %v383, %v381
    %v518 = vpack.c.b16 %v386, %v384
    %v519 = vpack.c.b16 %v387, %v385
    %v520 = vpack.c.b16 %v390, %v388
    %v521 = vpack.c.b16 %v391, %v389
    %v522 = vpack.c.b16 %v394, %v392
    %v523 = vpack.c.b16 %v395, %v393
    %v524 = vpack.c.b16 %v398, %v396
    %v525 = vpack.c.b16 %v399, %v397
    %v526 = vpack.c.b16 %v402, %v400
    %v527 = vpack.c.b16 %v403, %v401
    %v528 = vpack.c.b16 %v406, %v404
    %v529 = vpack.c.b16 %v407, %v405
    %v530 = vpack.c.b16 %v410, %v408
    %v531 = vpack.c.b16 %v411, %v409
    %v532 = vpack.c.b16 %v414, %v412
    %v533 = vpack.c.b16 %v415, %v413
    %v534 = vpack.c.b16 %v418, %v416
    %v535 = vpack.c.b16 %v419, %v417
    %v536 = vpack.c.b16 %v422, %v420
    %v537 = vpack.c.b16 %v423, %v421
    %v538 = vpack.c.b16 %v426, %v424
    %v539 = vpack.c.b16 %v427, %v425
    %v540 = vpack.c.b16 %v430, %v428
    %v541 = vpack.c.b16 %v431, %v429
    %v542 = vpack.c.b16 %v434, %v432
    %v543 = vpack.c.b16 %v435, %v433
    %v544 = vpack.c.b16 %v438, %v436
    %v545 = vpack.c.b16 %v439, %v437
    %v546 = vpack.c.b16 %v442, %v440
    %v547 = vpack.c.b16 %v443, %v441
    %v548 = vpack.c.b16 %v446, %v444
    %v549 = vpack.c.b16 %v447, %v445
    %v550 = vpack.c.b16 %v450, %v448
    %v551 = vpack.c.b16 %v451, %v449
    %v552 = vpack.c.b16 %v454, %v452
    %v553 = vpack.c.b16 %v455, %v453
    %vm652 = vcmask 130048
    %v654 = vsel %vm652, %v63, 0
    %656 = vmatprep.subr.bf16.mxu0 %v457
    %657 = vmatpush1.bf16.msra.mxu0 %v456
    %658 = vmatprep.subr.bf16.mxu0 %v459
    %659 = vmatpush1.bf16.msra.mxu0 %v458
    %660 = vmatprep.subr.bf16.mxu0 %v461
    %661 = vmatpush1.bf16.msra.mxu0 %v460
    %662 = vmatprep.subr.bf16.mxu0 %v463
    %663 = vmatpush1.bf16.msra.mxu0 %v462
    %664 = vmatprep.subr.bf16.mxu0 %v465
    %665 = vmatpush1.bf16.msra.mxu0 %v464
    %666 = vmatprep.subr.bf16.mxu0 %v467
    %667 = vmatpush1.bf16.msra.mxu0 %v466
    %668 = vmatprep.subr.bf16.mxu0 %v469
    %669 = vmatpush1.bf16.msra.mxu0 %v468
    %670 = vmatprep.subr.bf16.mxu0 %v471
    %671 = vmatpush1.bf16.msra.mxu0 %v470
    %672 = vmatprep.subr.bf16.mxu0 %v473
    %673 = vmatpush1.bf16.msra.mxu0 %v472
    %674 = vmatprep.subr.bf16.mxu0 %v475
    %675 = vmatpush1.bf16.msra.mxu0 %v474
    %676 = vmatprep.subr.bf16.mxu0 %v477
    %677 = vmatpush1.bf16.msra.mxu0 %v476
    %678 = vmatprep.subr.bf16.mxu0 %v479
    %679 = vmatpush1.bf16.msra.mxu0 %v478
    %680 = vmatprep.subr.bf16.mxu0 %v481
    %681 = vmatpush1.bf16.msra.mxu0 %v480
    %682 = vmatprep.subr.bf16.mxu0 %v483
    %683 = vmatpush1.bf16.msra.mxu0 %v482
    %684 = vmatprep.subr.bf16.mxu0 %v485
    %685 = vmatpush1.bf16.msra.mxu0 %v484
    %686 = vmatprep.subr.bf16.mxu0 %v487
    %687 = vmatpush1.bf16.msra.mxu0 %v486
    %688 = vmatprep.mubr.bf16.mxu0 %v58
    %689 = vmatmul.mubr.bf16.gmra.mrb[0].mxu0 %v57
    %v690 = vpop.f32.mrb[0].mxu0
    %v691 = vadd.f32 0.0, %v690
    %v692 = vpop.f32.mrb[0].mxu0
    %v693 = vadd.f32 0.0, %v692
    %v694 = vpop.f32.mrb[0].mxu0
    %v695 = vpop.f32.mrb[0].mxu0
    %696 = vdwg.mxu0
    %697 = vmatprep.subr.bf16.mxu0 %v489
    %698 = vmatpush1.bf16.msra.mxu0 %v488
    %699 = vmatprep.subr.bf16.mxu0 %v491
    %700 = vmatpush1.bf16.msra.mxu0 %v490
    %701 = vmatprep.subr.bf16.mxu0 %v493
    %702 = vmatpush1.bf16.msra.mxu0 %v492
    %703 = vmatprep.subr.bf16.mxu0 %v495
    %704 = vmatpush1.bf16.msra.mxu0 %v494
    %705 = vmatprep.subr.bf16.mxu0 %v497
    %706 = vmatpush1.bf16.msra.mxu0 %v496
    %707 = vmatprep.subr.bf16.mxu0 %v499
    %708 = vmatpush1.bf16.msra.mxu0 %v498
    %709 = vmatprep.subr.bf16.mxu0 %v501
    %710 = vmatpush1.bf16.msra.mxu0 %v500
    %711 = vmatprep.subr.bf16.mxu0 %v503
    %712 = vmatpush1.bf16.msra.mxu0 %v502
    %713 = vmatprep.subr.bf16.mxu0 %v505
    %714 = vmatpush1.bf16.msra.mxu0 %v504
    %715 = vmatprep.subr.bf16.mxu0 %v507
    %716 = vmatpush1.bf16.msra.mxu0 %v506
    %717 = vmatprep.subr.bf16.mxu0 %v509
    %718 = vmatpush1.bf16.msra.mxu0 %v508
    %719 = vmatprep.subr.bf16.mxu0 %v511
    %720 = vmatpush1.bf16.msra.mxu0 %v510
    %721 = vmatprep.subr.bf16.mxu0 %v513
    %722 = vmatpush1.bf16.msra.mxu0 %v512
    %723 = vmatprep.subr.bf16.mxu0 %v515
    %724 = vmatpush1.bf16.msra.mxu0 %v514
    %725 = vmatprep.subr.bf16.mxu0 %v517
    %726 = vmatpush1.bf16.msra.mxu0 %v516
    %727 = vmatprep.subr.bf16.mxu0 %v519
    %728 = vmatpush1.bf16.msra.mxu0 %v518
    %729 = vmatprep.mubr.bf16.mxu0 %v60
    %730 = vmatmul.mubr.bf16.gmra.mrb[0].mxu0 %v59
    %v731 = vpop.f32.mrb[0].mxu0
    %v732 = vadd.f32 %v691, %v731
    %v733 = vpop.f32.mrb[0].mxu0
    %v734 = vadd.f32 %v693, %v733
    %v735 = vpop.f32.mrb[0].mxu0
    %v736 = vpop.f32.mrb[0].mxu0
    %737 = vdwg.mxu0
    %738 = vmatprep.subr.bf16.mxu0 %v521
    %739 = vmatpush1.bf16.msra.mxu0 %v520
    %740 = vmatprep.subr.bf16.mxu0 %v523
    %741 = vmatpush1.bf16.msra.mxu0 %v522
    %742 = vmatprep.subr.bf16.mxu0 %v525
    %743 = vmatpush1.bf16.msra.mxu0 %v524
    %744 = vmatprep.subr.bf16.mxu0 %v527
    %745 = vmatpush1.bf16.msra.mxu0 %v526
    %746 = vmatprep.subr.bf16.mxu0 %v529
    %747 = vmatpush1.bf16.msra.mxu0 %v528
    %748 = vmatprep.subr.bf16.mxu0 %v531
    %749 = vmatpush1.bf16.msra.mxu0 %v530
    %750 = vmatprep.subr.bf16.mxu0 %v533
    %751 = vmatpush1.bf16.msra.mxu0 %v532
    %752 = vmatprep.subr.bf16.mxu0 %v535
    %753 = vmatpush1.bf16.msra.mxu0 %v534
    %754 = vmatprep.subr.bf16.mxu0 %v537
    %755 = vmatpush1.bf16.msra.mxu0 %v536
    %756 = vmatprep.subr.bf16.mxu0 %v539
    %757 = vmatpush1.bf16.msra.mxu0 %v538
    %758 = vmatprep.subr.bf16.mxu0 %v541
    %759 = vmatpush1.bf16.msra.mxu0 %v540
    %760 = vmatprep.subr.bf16.mxu0 %v543
    %761 = vmatpush1.bf16.msra.mxu0 %v542
    %762 = vmatprep.subr.bf16.mxu0 %v545
    %763 = vmatpush1.bf16.msra.mxu0 %v544
    %764 = vmatprep.subr.bf16.mxu0 %v547
    %765 = vmatpush1.bf16.msra.mxu0 %v546
    %766 = vmatprep.subr.bf16.mxu0 %v549
    %767 = vmatpush1.bf16.msra.mxu0 %v548
    %768 = vmatprep.subr.bf16.mxu0 %v551
    %769 = vmatpush1.bf16.msra.mxu0 %v550
    %770 = vmatprep.mubr.bf16.mxu0 %v62
    %771 = vmatmul.mubr.bf16.gmra.mrb[0].mxu0 %v61
    %v772 = vpop.f32.mrb[0].mxu0
    %v773 = vadd.f32 %v732, %v772
    %v774 = vpop.f32.mrb[0].mxu0
    %v775 = vadd.f32 %v734, %v774
    %v776 = vpop.f32.mrb[0].mxu0
    %v777 = vpop.f32.mrb[0].mxu0
    %778 = vdwg.mxu0
    %779 = vmatprep.subr.bf16.mxu0 %v553
    %780 = vmatpush1.bf16.msra.mxu0 %v552
    %781 = vmatprep.subr.bf16.mxu0 0
    %782 = vmatpush1.bf16.msra.mxu0 0
    %783 = vmatprep.subr.bf16.mxu0 0
    %784 = vmatpush1.bf16.msra.mxu0 0
    %785 = vmatprep.subr.bf16.mxu0 0
    %786 = vmatpush1.bf16.msra.mxu0 0
    %787 = vmatprep.subr.bf16.mxu0 0
    %788 = vmatpush1.bf16.msra.mxu0 0
    %789 = vmatprep.subr.bf16.mxu0 0
    %790 = vmatpush1.bf16.msra.mxu0 0
    %791 = vmatprep.subr.bf16.mxu0 0
    %792 = vmatpush1.bf16.msra.mxu0 0
    %793 = vmatprep.subr.bf16.mxu0 0
    %794 = vmatpush1.bf16.msra.mxu0 0
    %795 = vmatprep.subr.bf16.mxu0 0
    %796 = vmatpush1.bf16.msra.mxu0 0
    %797 = vmatprep.subr.bf16.mxu0 0
    %798 = vmatpush1.bf16.msra.mxu0 0
    %799 = vmatprep.subr.bf16.mxu0 0
    %800 = vmatpush1.bf16.msra.mxu0 0
    %801 = vmatprep.subr.bf16.mxu0 0
    %802 = vmatpush1.bf16.msra.mxu0 0
    %803 = vmatprep.subr.bf16.mxu0 0
    %804 = vmatpush1.bf16.msra.mxu0 0
    %805 = vmatprep.subr.bf16.mxu0 0
    %806 = vmatpush1.bf16.msra.mxu0 0
    %807 = vmatprep.subr.bf16.mxu0 0
    %808 = vmatpush1.bf16.msra.mxu0 0
    %809 = vmatprep.subr.bf16.mxu0 0
    %810 = vmatpush1.bf16.msra.mxu0 0
    %811 = vmatprep.mubr.bf16.mxu0 0
    %812 = vmatmul.mubr.bf16.gmra.mrb[0].mxu0 %v654
    %v813 = vpop.f32.mrb[0].mxu0
    %v814 = vadd.f32 %v773, %v813
    %v815 = vpop.f32.mrb[0].mxu0
    %v816 = vadd.f32 %v775, %v815
    %v817 = vpop.f32.mrb[0].mxu0
    %v818 = vpop.f32.mrb[0].mxu0
    %819 = vdwg.mxu0
    %v820 = vld [vmem:[%s4] ss:$8 sm:$0x3]
    %s821 = scalar_lea.vmem %s4, 1
    %v822 = vld [vmem:[%s821] ss:$8 sm:$0x3]
    %v823 = vrot.slane %v814, 4
    %v824 = vadd.f32 %v814, %v823
    %v825 = vrot.slane %v824, 2
    %v826 = vadd.f32 %v824, %v825
    %v827 = vrot.slane %v826, 1
    %v828 = vadd.f32 %v826, %v827
    %v829 = vrot.slane %v816, 4
    %v830 = vadd.f32 %v816, %v829
    %v831 = vrot.slane %v830, 2
    %v832 = vadd.f32 %v830, %v831
    %v833 = vrot.slane %v832, 1
    %v834 = vadd.f32 %v832, %v833
    %v835 = vrcp.pop 8.0
    %v836 = vmul.f32 %v828, %v835
    %v837 = vmul.f32 %v834, %v835
    %v838 = vsub.f32 %v814, %v836
    %v839 = vsub.f32 %v816, %v837
    %v840 = vmul.f32 %v838, %v838
    %v841 = vmul.f32 %v839, %v839
    %v842 = vrot.slane %v840, 4
    %v843 = vadd.f32 %v840, %v842
    %v844 = vrot.slane %v843, 2
    %v845 = vadd.f32 %v843, %v844
    %v846 = vrot.slane %v845, 1
    %v847 = vadd.f32 %v845, %v846
    %v848 = vrot.slane %v841, 4
    %v849 = vadd.f32 %v841, %v848
    %v850 = vrot.slane %v849, 2
    %v851 = vadd.f32 %v849, %v850
    %v852 = vrot.slane %v851, 1
    %v853 = vadd.f32 %v851, %v852
    %v854 = vmul.f32 %v847, %v835
    %v855 = vmul.f32 %v853, %v835
    %v856 = vadd.f32 %v854, 1e-05
    %v857 = vadd.f32 %v855, 1e-05
    %v858 = vrsqrt.pop %v856
    %v859 = vrsqrt.pop %v857
    %v862 = vcombine.low %v858, %v859
    %v864 = vunpack.c.l.s4 1966171168
    %v865 = vunpack.c.0.s8 %v864
    %v866 = vlaneseq
    %v867 = vshrl.u32 %v866, 7
    %v868 = vsub.s32 %v865, %v867
    %v869 = vrot.slane %v862, %v868
    %v871 = vunpack.c.l.s4 1966171168
    %v872 = vunpack.c.0.s8 %v871
    %v873 = vlaneseq
    %v874 = vshrl.u32 %v873, 7
    %v875 = vsub.s32 %v872, %v874
    %v876 = vrot.slane %v869, %v875
    %v878 = vmul.f32 %v820, %v876
    %v880 = vlaneseq
    %v881 = vshrl.u32 %v880, 7
    %v882 = vsub.s32 0, %v881
    %v883 = vrot.slane %v878, %v882
    %v884 = vlaneseq
    %v885 = vshrl.u32 %v884, 7
    %v886 = vsub.s32 1, %v885
    %v887 = vrot.slane %v878, %v886
    %v890 = vmul.f32 %v838, %v883
    %v891 = vmul.f32 %v839, %v887
    %v893 = vlaneseq
    %v894 = vshrl.u32 %v893, 7
    %v895 = vsub.s32 0, %v894
    %v896 = vrot.slane %v822, %v895
    %v897 = vlaneseq
    %v898 = vshrl.u32 %v897, 7
    %v899 = vsub.s32 1, %v898
    %v900 = vrot.slane %v822, %v899
    %v903 = vadd.f32 %v890, %v896
    %v904 = vadd.f32 %v891, %v900
    %v905 = vmax.f32 %v903, 0.0
    %v906 = vmax.f32 %v904, 0.0
    %v907 = vpack.c.bf16 %v905, %v905
    %v908 = vpack.c.bf16 %v906, %v906
    %v909 = vld [vmem:[#allocation2] sm:$0xf]
    %v910 = vld [vmem:[#allocation2 + $0x4] sm:$0xf]
    %v911 = vld [vmem:[#allocation2 + $0x8] sm:$0xf]
    %v912 = vld [vmem:[#allocation2 + $0xc] sm:$0xf]
    %v913 = vld [vmem:[#allocation2 + $0x10] sm:$0xf]
    %v914 = vld [vmem:[#allocation2 + $0x14] sm:$0xf]
    %v915 = vld [vmem:[#allocation2 + $0x18] sm:$0xf]
    %v916 = vld [vmem:[#allocation2 + $0x1c] sm:$0xf]
    %v917 = vld [vmem:[#allocation2 + $0x20] sm:$0xf]
    %v918 = vld [vmem:[#allocation2 + $0x24] sm:$0xf]
    %v919 = vld [vmem:[#allocation2 + $0x28] sm:$0xf]
    %v920 = vld [vmem:[#allocation2 + $0x2c] sm:$0xf]
    %v921 = vld [vmem:[#allocation2 + $0x30] sm:$0xf]
    %v922 = vld [vmem:[#allocation2 + $0x34] sm:$0xf]
    %v923 = vld [vmem:[#allocation2 + $0x38] sm:$0xf]
    %v924 = vld [vmem:[#allocation2 + $0x3c] sm:$0xf]
    %v925 = vld [vmem:[#allocation2 + $0x40] sm:$0xf]
    %v926 = vld [vmem:[#allocation2 + $0x44] sm:$0xf]
    %v927 = vld [vmem:[#allocation2 + $0x48] sm:$0xf]
    %v928 = vld [vmem:[#allocation2 + $0x4c] sm:$0xf]
    %v929 = vld [vmem:[#allocation2 + $0x50] sm:$0xf]
    %v930 = vld [vmem:[#allocation2 + $0x54] sm:$0xf]
    %v931 = vld [vmem:[#allocation2 + $0x58] sm:$0xf]
    %v932 = vld [vmem:[#allocation2 + $0x5c] sm:$0xf]
    %v933 = vld [vmem:[#allocation2 + $0x60] sm:$0xf]
    %v934 = vld [vmem:[#allocation2 + $0x64] sm:$0xf]
    %v935 = vld [vmem:[#allocation2 + $0x68] sm:$0xf]
    %v936 = vld [vmem:[#allocation2 + $0x6c] sm:$0xf]
    %v937 = vld [vmem:[#allocation2 + $0x70] sm:$0xf]
    %v938 = vld [vmem:[#allocation2 + $0x74] sm:$0xf]
    %v939 = vld [vmem:[#allocation2 + $0x78] sm:$0xf]
    %v940 = vld [vmem:[#allocation2 + $0x7c] sm:$0xf]
    %v973 = vunpack.c.l.b16 %v909
    %v974 = vunpack.c.l.b16 %v910
    %v975 = vunpack.c.l.b16 %v911
    %v976 = vunpack.c.l.b16 %v912
    %v977 = vunpack.c.l.b16 %v913
    %v978 = vunpack.c.l.b16 %v914
    %v979 = vunpack.c.l.b16 %v915
    %v980 = vunpack.c.l.b16 %v916
    %v981 = vunpack.c.l.b16 %v917
    %v982 = vunpack.c.l.b16 %v918
    %v983 = vunpack.c.l.b16 %v919
    %v984 = vunpack.c.l.b16 %v920
    %v985 = vunpack.c.l.b16 %v921
    %v986 = vunpack.c.l.b16 %v922
    %v987 = vunpack.c.l.b16 %v923
    %v988 = vunpack.c.l.b16 %v924
    %v989 = vunpack.c.l.b16 %v925
    %v990 = vunpack.c.l.b16 %v926
    %v991 = vunpack.c.l.b16 %v927
    %v992 = vunpack.c.l.b16 %v928
    %v993 = vunpack.c.l.b16 %v929
    %v994 = vunpack.c.l.b16 %v930
    %v995 = vunpack.c.l.b16 %v931
    %v996 = vunpack.c.l.b16 %v932
    %v997 = vunpack.c.l.b16 %v933
    %v998 = vunpack.c.l.b16 %v934
    %v999 = vunpack.c.l.b16 %v935
    %v1000 = vunpack.c.l.b16 %v936
    %v1001 = vunpack.c.l.b16 %v937
    %v1002 = vunpack.c.l.b16 %v938
    %v1003 = vunpack.c.l.b16 %v939
    %v1004 = vunpack.c.l.b16 %v940
    %v1005 = vpack.c.b16 %v974, %v973
    %v1006 = vpack.c.b16 %v976, %v975
    %v1007 = vpack.c.b16 %v978, %v977
    %v1008 = vpack.c.b16 %v980, %v979
    %v1009 = vpack.c.b16 %v982, %v981
    %v1010 = vpack.c.b16 %v984, %v983
    %v1011 = vpack.c.b16 %v986, %v985
    %v1012 = vpack.c.b16 %v988, %v987
    %v1013 = vpack.c.b16 %v990, %v989
    %v1014 = vpack.c.b16 %v992, %v991
    %v1015 = vpack.c.b16 %v994, %v993
    %v1016 = vpack.c.b16 %v996, %v995
    %v1017 = vpack.c.b16 %v998, %v997
    %v1018 = vpack.c.b16 %v1000, %v999
    %v1019 = vpack.c.b16 %v1002, %v1001
    %v1020 = vpack.c.b16 %v1004, %v1003
    %1037 = vmatprep.subr.bf16.mxu0 0
    %1038 = vmatpush1.bf16.msra.mxu0 %v1005
    %1039 = vmatprep.subr.bf16.mxu0 0
    %1040 = vmatpush1.bf16.msra.mxu0 %v1006
    %1041 = vmatprep.subr.bf16.mxu0 0
    %1042 = vmatpush1.bf16.msra.mxu0 %v1007
    %1043 = vmatprep.subr.bf16.mxu0 0
    %1044 = vmatpush1.bf16.msra.mxu0 %v1008
    %1045 = vmatprep.subr.bf16.mxu0 0
    %1046 = vmatpush1.bf16.msra.mxu0 %v1009
    %1047 = vmatprep.subr.bf16.mxu0 0
    %1048 = vmatpush1.bf16.msra.mxu0 %v1010
    %1049 = vmatprep.subr.bf16.mxu0 0
    %1050 = vmatpush1.bf16.msra.mxu0 %v1011
    %1051 = vmatprep.subr.bf16.mxu0 0
    %1052 = vmatpush1.bf16.msra.mxu0 %v1012
    %1053 = vmatprep.subr.bf16.mxu0 0
    %1054 = vmatpush1.bf16.msra.mxu0 %v1013
    %1055 = vmatprep.subr.bf16.mxu0 0
    %1056 = vmatpush1.bf16.msra.mxu0 %v1014
    %1057 = vmatprep.subr.bf16.mxu0 0
    %1058 = vmatpush1.bf16.msra.mxu0 %v1015
    %1059 = vmatprep.subr.bf16.mxu0 0
    %1060 = vmatpush1.bf16.msra.mxu0 %v1016
    %1061 = vmatprep.subr.bf16.mxu0 0
    %1062 = vmatpush1.bf16.msra.mxu0 %v1017
    %1063 = vmatprep.subr.bf16.mxu0 0
    %1064 = vmatpush1.bf16.msra.mxu0 %v1018
    %1065 = vmatprep.subr.bf16.mxu0 0
    %1066 = vmatpush1.bf16.msra.mxu0 %v1019
    %1067 = vmatprep.subr.bf16.mxu0 0
    %1068 = vmatpush1.bf16.msra.mxu0 %v1020
    %1069 = vmatprep.mubr.bf16.mxu0 %v908
    %1070 = vmatmul.mubr.bf16.gmra.mrb[0].mxu0 %v907
    %v1071 = vpop.f32.mrb[0].mxu0
    %v1072 = vadd.f32 0.0, %v1071
    %v1073 = vpop.f32.mrb[0].mxu0
    %v1074 = vpop.f32.mrb[0].mxu0
    %v1075 = vpop.f32.mrb[0].mxu0
    %1076 = vdwg.mxu0
    %v1077 = vld [vmem:[%s4 + $0x2] ss:$0 sm:$0xff]
    %v1078 = vld [vmem:[%s4 + $0x3] ss:$0 sm:$0xff]
    %v1079 = vrot.slane %v1072, 4
    %v1080 = vadd.f32 %v1072, %v1079
    %v1081 = vrot.slane %v1080, 2
    %v1082 = vadd.f32 %v1080, %v1081
    %v1083 = vrot.slane %v1082, 1
    %v1084 = vadd.f32 %v1082, %v1083
    %v1085 = vmul.f32 %v1084, %v835
    %v1086 = vsub.f32 %v1072, %v1085
    %v1087 = vmul.f32 %v1086, %v1086
    %v1088 = vrot.slane %v1087, 4
    %v1089 = vadd.f32 %v1087, %v1088
    %v1090 = vrot.slane %v1089, 2
    %v1091 = vadd.f32 %v1089, %v1090
    %v1092 = vrot.slane %v1091, 1
    %v1093 = vadd.f32 %v1091, %v1092
    %v1094 = vmul.f32 %v1093, %v835
    %v1095 = vadd.f32 %v1094, 1e-05
    %v1096 = vrsqrt.pop %v1095
    %v1097 = vmul.f32 %v1077, %v1096
    %v1098 = vmul.f32 %v1086, %v1097
    %v1099 = vadd.f32 %v1098, %v1078
    %v1100 = vmax.f32 %v1099, 0.0
    %v1101 = vpack.c.bf16 %v1100, %v1100
    %v1102 = vld [vmem:[#allocation5] sm:$0xf]
    %v1103 = vld [vmem:[#allocation5 + $0x4] sm:$0xf]
    %v1104 = vld [vmem:[#allocation5 + $0x8] sm:$0xf]
    %v1105 = vld [vmem:[#allocation5 + $0xc] sm:$0xf]
    %v1106 = vld [vmem:[#allocation5 + $0x10] sm:$0xf]
    %v1107 = vld [vmem:[#allocation5 + $0x14] sm:$0xf]
    %v1108 = vld [vmem:[#allocation5 + $0x18] sm:$0xf]
    %v1109 = vld [vmem:[#allocation5 + $0x1c] sm:$0xf]
    %v1110 = vld [vmem:[#allocation5 + $0x20] sm:$0xf]
    %v1111 = vld [vmem:[#allocation5 + $0x24] sm:$0xf]
    %v1112 = vld [vmem:[#allocation5 + $0x28] sm:$0xf]
    %v1113 = vld [vmem:[#allocation5 + $0x2c] sm:$0xf]
    %v1114 = vld [vmem:[#allocation5 + $0x30] sm:$0xf]
    %v1115 = vld [vmem:[#allocation5 + $0x34] sm:$0xf]
    %v1116 = vld [vmem:[#allocation5 + $0x38] sm:$0xf]
    %v1117 = vld [vmem:[#allocation5 + $0x3c] sm:$0xf]
    %v1118 = vld [vmem:[%s4 + $0x4] ss:$0 sm:$0xff]
    %v1135 = vunpack.c.l.b16 %v1102
    %v1136 = vunpack.c.l.b16 %v1103
    %v1137 = vunpack.c.l.b16 %v1104
    %v1138 = vunpack.c.l.b16 %v1105
    %v1139 = vunpack.c.l.b16 %v1106
    %v1140 = vunpack.c.l.b16 %v1107
    %v1141 = vunpack.c.l.b16 %v1108
    %v1142 = vunpack.c.l.b16 %v1109
    %v1143 = vunpack.c.l.b16 %v1110
    %v1144 = vunpack.c.l.b16 %v1111
    %v1145 = vunpack.c.l.b16 %v1112
    %v1146 = vunpack.c.l.b16 %v1113
    %v1147 = vunpack.c.l.b16 %v1114
    %v1148 = vunpack.c.l.b16 %v1115
    %v1149 = vunpack.c.l.b16 %v1116
    %v1150 = vunpack.c.l.b16 %v1117
    %v1151 = vpack.c.b16 %v1136, %v1135
    %v1152 = vpack.c.b16 %v1138, %v1137
    %v1153 = vpack.c.b16 %v1140, %v1139
    %v1154 = vpack.c.b16 %v1142, %v1141
    %v1155 = vpack.c.b16 %v1144, %v1143
    %v1156 = vpack.c.b16 %v1146, %v1145
    %v1157 = vpack.c.b16 %v1148, %v1147
    %v1158 = vpack.c.b16 %v1150, %v1149
    %1167 = vmatprep.subr.bf16.mxu0 0
    %1168 = vmatpush1.bf16.msra.mxu0 %v1151
    %1169 = vmatprep.subr.bf16.mxu0 0
    %1170 = vmatpush1.bf16.msra.mxu0 %v1152
    %1171 = vmatprep.subr.bf16.mxu0 0
    %1172 = vmatpush1.bf16.msra.mxu0 %v1153
    %1173 = vmatprep.subr.bf16.mxu0 0
    %1174 = vmatpush1.bf16.msra.mxu0 %v1154
    %1175 = vmatprep.subr.bf16.mxu0 0
    %1176 = vmatpush1.bf16.msra.mxu0 %v1155
    %1177 = vmatprep.subr.bf16.mxu0 0
    %1178 = vmatpush1.bf16.msra.mxu0 %v1156
    %1179 = vmatprep.subr.bf16.mxu0 0
    %1180 = vmatpush1.bf16.msra.mxu0 %v1157
    %1181 = vmatprep.subr.bf16.mxu0 0
    %1182 = vmatpush1.bf16.msra.mxu0 %v1158
    %1183 = vmatprep.subr.bf16.mxu0 0
    %1184 = vmatpush1.bf16.msra.mxu0 0
    %1185 = vmatprep.subr.bf16.mxu0 0
    %1186 = vmatpush1.bf16.msra.mxu0 0
    %1187 = vmatprep.subr.bf16.mxu0 0
    %1188 = vmatpush1.bf16.msra.mxu0 0
    %1189 = vmatprep.subr.bf16.mxu0 0
    %1190 = vmatpush1.bf16.msra.mxu0 0
    %1191 = vmatprep.subr.bf16.mxu0 0
    %1192 = vmatpush1.bf16.msra.mxu0 0
    %1193 = vmatprep.subr.bf16.mxu0 0
    %1194 = vmatpush1.bf16.msra.mxu0 0
    %1195 = vmatprep.subr.bf16.mxu0 0
    %1196 = vmatpush1.bf16.msra.mxu0 0
    %1197 = vmatprep.subr.bf16.mxu0 0
    %1198 = vmatpush1.bf16.msra.mxu0 0
    %1199 = vmatprep.mubr.bf16.mxu0 0
    %1200 = vmatmul.mubr.bf16.gmra.mrb[0].mxu0 %v1101
    %v1201 = vpop.f32.mrb[0].mxu0
    %v1202 = vadd.f32 %v1118, %v1201
    %v1203 = vpop.f32.mrb[0].mxu0
    %v1204 = vpop.f32.mrb[0].mxu0
    %v1205 = vpop.f32.mrb[0].mxu0
    %1206 = vdwg.mxu0
    %1207 = vst [vmem:[#allocation7] sm:$0xff] %v1202
    // Predicated region
    $region30: #{threefc_forward_padded.1} parent=1 // pred_check
      _
    $region31: #{threefc_forward_padded.1} parent=1 // pred_check_branch
      %1209 = sbr.rel (0) target = $region33
    $region32: #{threefc_forward_padded.1} parent=1 // pred_region
      %s1211 = ssub.s32 128, 128
      %1212 = vsyncadd [#allocation4], %s1211
      %s1214 = sshll.u32 [#allocation7], 4
      %s1215 = int_to_ptr.vmem [resolvable:$true] %s1214
      %1217 = dma.vmem_to_hbm [thread:$0]  %s1215, 128, %s5, [#allocation4]
    $region33: #{threefc_forward_padded.1} parent=1 // pred_fallthru
      _
    // Predicated region
    $region34: #{threefc_forward_padded.1} parent=1 // pred_check
      _
    $region35: #{threefc_forward_padded.1} parent=1 // pred_check_branch
      %1219 = sbr.rel (0) target = $region37
    $region36: #{threefc_forward_padded.1} parent=1 // pred_region
      %1220 = dma.done [#allocation4], 128
    $region37: #{threefc_forward_padded.1} parent=1 // pred_fallthru
      _
    %1221 = vsyncpa [#allocation3], 1
    %1222 = vsyncpa [#allocation6], 1
    %1223 = vsyncpa [#allocation4], 1

</llo_original>
